<compile_context>
chip_gen: v7x
topology: tpu7x:2x2x1
jax: 0.10.0
libtpu: 0.0.40
codegen_flags: <defaults>
</compile_context>

<pallas_src>
import functools
import math

import jax
import jax.numpy as jnp
from jax.experimental import pallas as pl
from jax.experimental.pallas import tpu as pltpu


def _round_up(x, m):
    return ((x + m - 1) // m) * m


def _tpu_params():
    """(per-core VMEM bytes, # TensorCores per Pallas device) with safe fallbacks."""
    vmem_cap = 64 * (1 << 20)          # conservative default (v7x per-core VMEM)
    num_tc = 1
    try:
        cap = int(getattr(pltpu.get_tpu_info(), "vmem_capacity_bytes", 0))
        if cap > 0:
            vmem_cap = max(16 * (1 << 20), min(cap, 128 * (1 << 20)))
    except Exception:
        pass
    try:
        kind = jax.devices()[0].device_kind.lower()
        # Chips where one Pallas device has 2 TensorCores (megacore / v7x).
        if ("v4" in kind) or ("v5p" in kind) or ("v7" in kind) or ("tpu7" in kind):
            num_tc = 2
    except Exception:
        pass
    return vmem_cap, num_tc


def _accum_block(p_ref, m_ref, num_ref, den1_ref, den2_ref, *,
                 n_strips, tail_cols, grp, unroll):
    """Accumulate sum(p*m), sum(p*p), sum(m*m) of the current (rows, tile)
    block into the resident (rows, 128) lane-parallel f32 accumulators.

    Strip loop over 128-wide column slices: per strip 2 loads + upcast + 3
    fused multiply-accumulates into vreg carries. `tail_cols` (static) > 0
    only for the single ragged block: those extra columns are masked before
    use so stale VMEM (even NaN) contributes exactly zero.
    """
    rows = num_ref.shape[0]
    for r0 in range(0, rows, grp):                 # static row groups, bounds vreg carries
        rg = min(grp, rows - r0)
        zero = jnp.zeros((rg, 128), jnp.float32)

        def strip(k, carry, r0=r0, rg=rg):
            na, d1a, d2a = carry
            off = pl.multiple_of(k * 128, 128)
            p = p_ref[pl.ds(r0, rg), pl.ds(off, 128)].astype(jnp.float32)
            m = m_ref[pl.ds(r0, rg), pl.ds(off, 128)].astype(jnp.float32)
            return (na + p * m, d1a + p * p, d2a + m * m)

        na, d1a, d2a = jax.lax.fori_loop(
            0, n_strips, strip, (zero, zero, zero),
            unroll=max(1, min(unroll, max(n_strips, 1))))

        if tail_cols:                              # static: ragged block only
            off = n_strips * 128
            keep = jax.lax.broadcasted_iota(jnp.int32, (rg, 128), 1) < tail_cols
            p = jnp.where(keep,
                          p_ref[pl.ds(r0, rg), pl.ds(off, 128)].astype(jnp.float32), 0.0)
            m = jnp.where(keep,
                          m_ref[pl.ds(r0, rg), pl.ds(off, 128)].astype(jnp.float32), 0.0)
            na = na + p * m
            d1a = d1a + p * p
            d2a = d2a + m * m

        num_ref[pl.ds(r0, rg), :] += na
        den1_ref[pl.ds(r0, rg), :] += d1a
        den2_ref[pl.ds(r0, rg), :] += d2a


def _dice_sums_kernel(p_ref, m_ref, num_ref, den1_ref, den2_ref, *,
                      blocks_per_chunk, n_blocks, full_strips, has_ragged,
                      ragged_strips, ragged_tail, grp, unroll):
    j = pl.program_id(1)                           # reduction ("arbitrary") axis

    @pl.when(j == 0)
    def _init():
        num_ref[...] = jnp.zeros_like(num_ref)
        den1_ref[...] = jnp.zeros_like(den1_ref)
        den2_ref[...] = jnp.zeros_like(den2_ref)

    accum = functools.partial(_accum_block, p_ref, m_ref, num_ref, den1_ref,
                              den2_ref, grp=grp, unroll=unroll)

    if not has_ragged:                             # static: no masking anywhere
        accum(n_strips=full_strips, tail_cols=0)
    elif n_blocks == 1:                            # static: the only block is ragged
        accum(n_strips=ragged_strips, tail_cols=ragged_tail)
    else:                                          # mask only the one ragged block
        blk = pl.program_id(0) * blocks_per_chunk + j

        @pl.when(blk != n_blocks - 1)
        def _full():
            accum(n_strips=full_strips, tail_cols=0)

        @pl.when(blk == n_blocks - 1)
        def _ragged():
            accum(n_strips=ragged_strips, tail_cols=ragged_tail)


def dice_loss_multiclass(output, mask, *, max_tile_cols=None):
    """output, mask: (B, C, H, W) floats -> scalar float32 loss."""
    assert output.shape == mask.shape and output.ndim == 4
    B, C, H, W = output.shape
    BC = B * C
    S = H * W

    # Sublane-occupancy fold: (BC, S) -> (BC*G, S/G) so rows are a multiple of 8.
    G = 8 // math.gcd(BC, 8)
    if G > 1 and S % G != 0:
        G = 1
    rows = BC * G
    cols = S // G

    p = output.reshape(rows, cols)
    m = mask.reshape(rows, cols)

    # Tiny inputs only: pad the lane axis up to one lane row (cheap, rare).
    if cols < 128:
        p = jnp.pad(p, ((0, 0), (0, 128 - cols)))
        m = jnp.pad(m, ((0, 0), (0, 128 - cols)))
        cols = 128

    vmem_cap, num_tc = _tpu_params()

    # Generation-aware tile sizing: 2 inputs x 2 pipeline buffers held within
    # ~half of VMEM. Inputs keep their HBM dtype (layout-padded accounting).
    def _sublane(dt):
        return 8 * max(1, 4 // jnp.dtype(dt).itemsize)

    bytes_per_128 = 2 * 128 * (
        _round_up(rows, _sublane(p.dtype)) * jnp.dtype(p.dtype).itemsize +
        _round_up(rows, _sublane(m.dtype)) * jnp.dtype(m.dtype).itemsize)
    in_budget = max(2 << 20, vmem_cap // 2)
    tile = min(_round_up(cols, 128), max(512, (in_budget // bytes_per_128) * 128))
    if max_tile_cols is not None:                  # test hook / manual override
        tile = max(128, min(tile, _round_up(max_tile_cols, 128)))

    n_blocks = pl.cdiv(cols, tile)
    n_chunks = 1
    if num_tc >= 2 and n_blocks >= 2:
        if n_blocks % 2:                           # shave tile so the split is even
            t2 = _round_up(pl.cdiv(cols, n_blocks + 1), 128)
            if pl.cdiv(cols, t2) % 2 == 0:
                tile = t2
                n_blocks = pl.cdiv(cols, tile)
        if n_blocks % 2 == 0:
            n_chunks = 2
    blocks_per_chunk = n_blocks // n_chunks

    valid_last = cols - (n_blocks - 1) * tile      # static
    has_ragged = valid_last != tile

    # Row-group / unroll heuristic to keep live vregs bounded.
    if rows <= 8:
        grp, unroll = rows, 8
    elif rows <= 16:
        grp, unroll = rows, 4
    elif rows <= 32:
        grp, unroll = rows, 2
    else:
        grp, unroll = 32, 2

    needed = ((tile // 128) * bytes_per_128            # double-buffered input blocks
              + 3 * 2 * _round_up(rows, 8) * 128 * 4   # accumulator output blocks
              + (2 << 20))                             # headroom
    vmem_limit = int(min(int(vmem_cap * 0.95), max(needed, 16 << 20)))

    kernel = functools.partial(
        _dice_sums_kernel,
        blocks_per_chunk=blocks_per_chunk, n_blocks=n_blocks,
        full_strips=tile // 128, has_ragged=has_ragged,
        ragged_strips=valid_last // 128, ragged_tail=valid_last % 128,
        grp=grp, unroll=unroll)

    in_spec = pl.BlockSpec((rows, tile), lambda c, j: (0, c * blocks_per_chunk + j))
    out_spec = pl.BlockSpec((None, rows, 128), lambda c, j: (c, 0, 0))
    out_shape = (jax.ShapeDtypeStruct((n_chunks, rows, 128), jnp.float32),) * 3

    num_p, den1_p, den2_p = pl.pallas_call(
        kernel,
        out_shape=out_shape,
        grid_spec=pltpu.PrefetchScalarGridSpec(
            num_scalar_prefetch=0,
            grid=(n_chunks, blocks_per_chunk),
            in_specs=[in_spec, in_spec],
            out_specs=[out_spec, out_spec, out_spec],
        ),
        compiler_params=pltpu.CompilerParams(
            dimension_semantics=("parallel", "arbitrary"),
            vmem_limit_bytes=vmem_limit),
    )(p, m)

    # Tiny final combine in plain JAX (a few hundred floats at most).
    def _finish(part):
        s = jnp.sum(part, axis=(0, 2))             # (rows,)
        return jnp.sum(s.reshape(BC, G), axis=1)   # (BC,) == (B, C) flattened

    num, den1, den2 = _finish(num_p), _finish(den1_p), _finish(den2_p)
    eps = jnp.float32(1e-07)
    dice = 2.0 * (num + eps) / (den1 + den2 + eps)
    return jnp.float32(1.0) - jnp.sum(dice) / jnp.float32(B)


def _reference_dice_loss(output, mask):
    """Pure-JAX reference of the intended PyTorch semantics."""
    eps = 1e-07
    o = output.astype(jnp.float32)
    mk = mask.astype(jnp.float32)
    num = jnp.sum(o * mk, axis=(2, 3))
    den1 = jnp.sum(o * o, axis=(2, 3))
    den2 = jnp.sum(mk * mk, axis=(2, 3))
    dice = 2.0 * (num + eps) / (den1 + den2 + eps)
    dice_eso = jnp.sum(dice, axis=1)
    return 1.0 - jnp.sum(dice_eso) / output.shape[0]


if __name__ == "__main__":
    key = jax.random.PRNGKey(0)
    k1, k2, k3, k4, k5, k6 = jax.random.split(key, 6)

    # 1) Module-implied small shape (B=2, C=4, H=W=16): single block, no mask.
    B, C, H, W = 2, 4, 16, 16
    out1 = jax.nn.softmax(jax.random.normal(k1, (B, C, H, W), jnp.float32), axis=1)
    msk1 = jax.nn.one_hot(jax.random.randint(k2, (B, H, W), 0, C), C, axis=1,
                          dtype=jnp.float32)
    loss1 = jax.block_until_ready(dice_loss_multiclass(out1, msk1))
    ref1 = jax.block_until_ready(_reference_dice_loss(out1, msk1))
    assert jnp.allclose(loss1, ref1, rtol=1e-5, atol=1e-5), (loss1, ref1)

    # 2) Ragged last tile + sublane fold (BC=2 -> 8 rows).
    B2, C2, H2, W2 = 1, 2, 100, 100
    out2 = jax.nn.softmax(jax.random.normal(k3, (B2, C2, H2, W2), jnp.float32), axis=1)
    msk2 = jax.nn.one_hot(jax.random.randint(k4, (B2, H2, W2), 0, C2), C2, axis=1,
                          dtype=jnp.float32)
    loss2 = jax.block_until_ready(dice_loss_multiclass(out2, msk2))
    ref2 = jax.block_until_ready(_reference_dice_loss(out2, msk2))
    assert jnp.allclose(loss2, ref2, rtol=1e-5, atol=1e-5), (loss2, ref2)

    # 3) Same data, forced small tile: multi-block grid, pl.when ragged dispatch
    #    and (on 2-TensorCore chips) the even 2-chunk "parallel" split.
    loss3 = jax.block_until_ready(dice_loss_multiclass(out2, msk2, max_tile_cols=256))
    assert jnp.allclose(loss3, ref2, rtol=1e-5, atol=1e-5), (loss3, ref2)

    # 4) Rows not a multiple of 8 and spatial extent < 128 (pad path).
    B4, C4, H4, W4 = 1, 3, 7, 13
    out4 = jax.nn.softmax(jax.random.normal(k5, (B4, C4, H4, W4), jnp.float32), axis=1)
    msk4 = jax.nn.one_hot(jax.random.randint(k6, (B4, H4, W4), 0, C4), C4, axis=1,
                          dtype=jnp.float32)
    loss4 = jax.block_until_ready(dice_loss_multiclass(out4, msk4))
    ref4 = jax.block_until_ready(_reference_dice_loss(out4, msk4))
    assert jnp.allclose(loss4, ref4, rtol=1e-5, atol=1e-5), (loss4, ref4)

    print("KERNEL_OK")
</pallas_src>

<mosaic_0001>
module attributes {stable_mosaic.version = 11 : i64} {
  func.func @_dice_sums_kernel(%arg0: i32, %arg1: i32, %arg2: memref<8x256xf32, #tpu.memory_space<vmem>>, %arg3: memref<8x256xf32, #tpu.memory_space<vmem>>, %arg4: memref<1x8x128xf32, #tpu.memory_space<vmem>>, %arg5: memref<1x8x128xf32, #tpu.memory_space<vmem>>, %arg6: memref<1x8x128xf32, #tpu.memory_space<vmem>>) attributes {dimension_semantics = [#tpu.dimension_semantics<parallel>, #tpu.dimension_semantics<arbitrary>], iteration_bounds = array<i64: 1, 1>, scalar_prefetch = 0 : i64, scratch_operands = 0 : i64, tpu.core_type = #tpu.core_type<tc>, window_params = [{transform_indices = @transform_0, window_bounds = array<i64: 8, 256>}, {transform_indices = @transform_1, window_bounds = array<i64: 8, 256>}, {transform_indices = @transform_2, window_bounds = array<i64: 1, 8, 128>}, {transform_indices = @transform_3, window_bounds = array<i64: 1, 8, 128>}, {transform_indices = @transform_4, window_bounds = array<i64: 1, 8, 128>}]} {
    %c0_i32 = arith.constant 0 : i32
    %0 = arith.cmpi eq, %arg1, %c0_i32 : i32
    %1 = arith.extui %0 : i1 to i32
    %c0_i32_0 = arith.constant 0 : i32
    %2 = arith.cmpi ne, %1, %c0_i32_0 : i32
    scf.if %2 {
      %cst_24 = arith.constant 0.000000e+00 : f32
      %46 = vector.broadcast %cst_24 : f32 to vector<8x128xf32>
      %c0_25 = arith.constant 0 : index
      %c0_26 = arith.constant 0 : index
      %c0_27 = arith.constant 0 : index
      %47 = vector.load %arg4[%c0_25, %c0_26, %c0_27] : memref<1x8x128xf32, #tpu.memory_space<vmem>>, vector<1x8x128xf32>
      %48 = vector.shape_cast %47 : vector<1x8x128xf32> to vector<8x128xf32>
      %49 = vector.shape_cast %46 : vector<8x128xf32> to vector<1x8x128xf32>
      tpu.vector_store %arg4[%c0_25, %c0_26, %c0_27], %49 {strides = array<i32>} : memref<1x8x128xf32, #tpu.memory_space<vmem>>, vector<1x8x128xf32>,
      %cst_28 = arith.constant 0.000000e+00 : f32
      %50 = vector.broadcast %cst_28 : f32 to vector<8x128xf32>
      %c0_29 = arith.constant 0 : index
      %c0_30 = arith.constant 0 : index
      %c0_31 = arith.constant 0 : index
      %51 = vector.load %arg5[%c0_29, %c0_30, %c0_31] : memref<1x8x128xf32, #tpu.memory_space<vmem>>, vector<1x8x128xf32>
      %52 = vector.shape_cast %51 : vector<1x8x128xf32> to vector<8x128xf32>
      %53 = vector.shape_cast %50 : vector<8x128xf32> to vector<1x8x128xf32>
      tpu.vector_store %arg5[%c0_29, %c0_30, %c0_31], %53 {strides = array<i32>} : memref<1x8x128xf32, #tpu.memory_space<vmem>>, vector<1x8x128xf32>,
      %cst_32 = arith.constant 0.000000e+00 : f32
      %54 = vector.broadcast %cst_32 : f32 to vector<8x128xf32>
      %c0_33 = arith.constant 0 : index
      %c0_34 = arith.constant 0 : index
      %c0_35 = arith.constant 0 : index
      %55 = vector.load %arg6[%c0_33, %c0_34, %c0_35] : memref<1x8x128xf32, #tpu.memory_space<vmem>>, vector<1x8x128xf32>
      %56 = vector.shape_cast %55 : vector<1x8x128xf32> to vector<8x128xf32>
      %57 = vector.shape_cast %54 : vector<8x128xf32> to vector<1x8x128xf32>
      tpu.vector_store %arg6[%c0_33, %c0_34, %c0_35], %57 {strides = array<i32>} : memref<1x8x128xf32, #tpu.memory_space<vmem>>, vector<1x8x128xf32>,
    } else {
    }
    %cst = arith.constant 0.000000e+00 : f32
    %3 = vector.broadcast %cst : f32 to vector<8x128xf32>
    %c0_i32_1 = arith.constant 0 : i32
    %c128_i32 = arith.constant 128 : i32
    %4 = arith.muli %c0_i32_1, %c128_i32 : i32
    %5 = tpu.assume_multiple %4, 128 : i32
    %c0 = arith.constant 0 : index
    %6 = arith.index_cast %5 : i32 to index
    %7 = vector.load %arg2[%c0, %6] : memref<8x256xf32, #tpu.memory_space<vmem>>, vector<8x128xf32>
    %c0_2 = arith.constant 0 : index
    %8 = arith.index_cast %5 : i32 to index
    %9 = vector.load %arg3[%c0_2, %8] : memref<8x256xf32, #tpu.memory_space<vmem>>, vector<8x128xf32>
    %10 = arith.mulf %7, %9 : vector<8x128xf32>
    %11 = arith.addf %3, %10 : vector<8x128xf32>
    %12 = arith.mulf %7, %7 : vector<8x128xf32>
    %13 = arith.addf %3, %12 : vector<8x128xf32>
    %14 = arith.mulf %9, %9 : vector<8x128xf32>
    %15 = arith.addf %3, %14 : vector<8x128xf32>
    %c1_i32 = arith.constant 1 : i32
    %c128_i32_3 = arith.constant 128 : i32
    %16 = arith.muli %c1_i32, %c128_i32_3 : i32
    %17 = tpu.assume_multiple %16, 128 : i32
    %c0_4 = arith.constant 0 : index
    %18 = arith.index_cast %17 : i32 to index
    %19 = vector.load %arg2[%c0_4, %18] : memref<8x256xf32, #tpu.memory_space<vmem>>, vector<8x128xf32>
    %c0_5 = arith.constant 0 : index
    %20 = arith.index_cast %17 : i32 to index
    %21 = vector.load %arg3[%c0_5, %20] : memref<8x256xf32, #tpu.memory_space<vmem>>, vector<8x128xf32>
    %22 = arith.mulf %19, %21 : vector<8x128xf32>
    %23 = arith.addf %11, %22 : vector<8x128xf32>
    %24 = arith.mulf %19, %19 : vector<8x128xf32>
    %25 = arith.addf %13, %24 : vector<8x128xf32>
    %26 = arith.mulf %21, %21 : vector<8x128xf32>
    %27 = arith.addf %15, %26 : vector<8x128xf32>
    %c2_i32 = arith.constant 2 : i32
    %c0_6 = arith.constant 0 : index
    %c0_7 = arith.constant 0 : index
    %c0_8 = arith.constant 0 : index
    %28 = vector.load %arg4[%c0_6, %c0_7, %c0_8] : memref<1x8x128xf32, #tpu.memory_space<vmem>>, vector<1x8x128xf32>
    %29 = vector.shape_cast %28 : vector<1x8x128xf32> to vector<8x128xf32>
    %30 = arith.addf %29, %23 : vector<8x128xf32>
    %c0_9 = arith.constant 0 : index
    %c0_10 = arith.constant 0 : index
    %c0_11 = arith.constant 0 : index
    %31 = vector.load %arg4[%c0_9, %c0_10, %c0_11] : memref<1x8x128xf32, #tpu.memory_space<vmem>>, vector<1x8x128xf32>
    %32 = vector.shape_cast %31 : vector<1x8x128xf32> to vector<8x128xf32>
    %33 = vector.shape_cast %30 : vector<8x128xf32> to vector<1x8x128xf32>
    tpu.vector_store %arg4[%c0_9, %c0_10, %c0_11], %33 {strides = array<i32>} : memref<1x8x128xf32, #tpu.memory_space<vmem>>, vector<1x8x128xf32>,
    %c0_12 = arith.constant 0 : index
    %c0_13 = arith.constant 0 : index
    %c0_14 = arith.constant 0 : index
    %34 = vector.load %arg5[%c0_12, %c0_13, %c0_14] : memref<1x8x128xf32, #tpu.memory_space<vmem>>, vector<1x8x128xf32>
    %35 = vector.shape_cast %34 : vector<1x8x128xf32> to vector<8x128xf32>
    %36 = arith.addf %35, %25 : vector<8x128xf32>
    %c0_15 = arith.constant 0 : index
    %c0_16 = arith.constant 0 : index
    %c0_17 = arith.constant 0 : index
    %37 = vector.load %arg5[%c0_15, %c0_16, %c0_17] : memref<1x8x128xf32, #tpu.memory_space<vmem>>, vector<1x8x128xf32>
    %38 = vector.shape_cast %37 : vector<1x8x128xf32> to vector<8x128xf32>
    %39 = vector.shape_cast %36 : vector<8x128xf32> to vector<1x8x128xf32>
    tpu.vector_store %arg5[%c0_15, %c0_16, %c0_17], %39 {strides = array<i32>} : memref<1x8x128xf32, #tpu.memory_space<vmem>>, vector<1x8x128xf32>,
    %c0_18 = arith.constant 0 : index
    %c0_19 = arith.constant 0 : index
    %c0_20 = arith.constant 0 : index
    %40 = vector.load %arg6[%c0_18, %c0_19, %c0_20] : memref<1x8x128xf32, #tpu.memory_space<vmem>>, vector<1x8x128xf32>
    %41 = vector.shape_cast %40 : vector<1x8x128xf32> to vector<8x128xf32>
    %42 = arith.addf %41, %27 : vector<8x128xf32>
    %c0_21 = arith.constant 0 : index
    %c0_22 = arith.constant 0 : index
    %c0_23 = arith.constant 0 : index
    %43 = vector.load %arg6[%c0_21, %c0_22, %c0_23] : memref<1x8x128xf32, #tpu.memory_space<vmem>>, vector<1x8x128xf32>
    %44 = vector.shape_cast %43 : vector<1x8x128xf32> to vector<8x128xf32>
    %45 = vector.shape_cast %42 : vector<8x128xf32> to vector<1x8x128xf32>
    tpu.vector_store %arg6[%c0_21, %c0_22, %c0_23], %45 {strides = array<i32>} : memref<1x8x128xf32, #tpu.memory_space<vmem>>, vector<1x8x128xf32>,
    return
  }
  func.func @transform_0(%arg0: i32, %arg1: i32) -> (i32, i32) {
    %c1_i32 = arith.constant 1 : i32
    %0 = arith.muli %arg0, %c1_i32 : i32
    %1 = arith.addi %0, %arg1 : i32
    %c0_i32 = arith.constant 0 : i32
    %c0_i32_0 = arith.constant 0 : i32
    return %c0_i32, %1 : i32, i32
  }
  func.func @transform_1(%arg0: i32, %arg1: i32) -> (i32, i32) {
    %c1_i32 = arith.constant 1 : i32
    %0 = arith.muli %arg0, %c1_i32 : i32
    %1 = arith.addi %0, %arg1 : i32
    %c0_i32 = arith.constant 0 : i32
    %c0_i32_0 = arith.constant 0 : i32
    return %c0_i32, %1 : i32, i32
  }
  func.func @transform_2(%arg0: i32, %arg1: i32) -> (i32, i32, i32) {
    %c0_i32 = arith.constant 0 : i32
    %c0_i32_0 = arith.constant 0 : i32
    %c0_i32_1 = arith.constant 0 : i32
    return %arg0, %c0_i32, %c0_i32_0 : i32, i32, i32
  }
  func.func @transform_3(%arg0: i32, %arg1: i32) -> (i32, i32, i32) {
    %c0_i32 = arith.constant 0 : i32
    %c0_i32_0 = arith.constant 0 : i32
    %c0_i32_1 = arith.constant 0 : i32
    return %arg0, %c0_i32, %c0_i32_0 : i32, i32, i32
  }
  func.func @transform_4(%arg0: i32, %arg1: i32) -> (i32, i32, i32) {
    %c0_i32 = arith.constant 0 : i32
    %c0_i32_0 = arith.constant 0 : i32
    %c0_i32_1 = arith.constant 0 : i32
    return %arg0, %c0_i32, %c0_i32_0 : i32, i32, i32
  }
}

</mosaic_0001>

<llo_original>
// kernel: tpu_custom_call.1
$region0: #{tpu_custom_call.1}
  #allocation0 [shape = 'u32[]', space=smem, size = 0x4, offset = 0x4, fixed_abs, tag = 'smem constant byte address 0x4 - core index']
  #allocation1 [shape = 'u32[144,128]{1,0:T(1,128)}', space=vmem, size = 0x12000, scoped, tag = 'internal scratch']
  %s0 = inlined_call_operand.hbm [shape: f32[8,256], index: 0, kind: input, shape index: {}]
  %s1 = inlined_call_operand.hbm [shape: f32[8,256], index: 1, kind: input, shape index: {}]
  %s2 = inlined_call_operand.hbm [shape: f32[1,8,128], index: 2, kind: output, shape index: {0}]
  %s3 = inlined_call_operand.hbm [shape: f32[1,8,128], index: 3, kind: output, shape index: {1}]
  %s4 = inlined_call_operand.hbm [shape: f32[1,8,128], index: 4, kind: output, shape index: {2}]
  %5 = xla_tuple %s2, %s3, %s4
  %s6 = sld [smem:[#allocation0]]
  $region46: #{tpu_custom_call.1} parent=0
    _
  %s8 = ssub.s32 1, %s6
  %s9 = scalar_select 0, %s8, %s6
  $region1: #{tpu_custom_call.1} parent=0
    #allocation2 [shape = 'u8[8192]{0}', space=vmem, size = 0x2000, scoped, tag = 'input window, operand 0, single buffered']
    #allocation3 [shape = 's32[1]{0}', space=sflag, size = 0x4, scoped, tag = 'scoped memory for tpu_custom_call.1']
    #allocation4 [shape = 's32[1]{0}', space=sflag, size = 0x4, scoped, tag = 'scoped memory for tpu_custom_call.1']
    #allocation5 [shape = 'u8[8192]{0}', space=vmem, size = 0x2000, scoped, tag = 'input window, operand 1, single buffered']
    #allocation6 [shape = 's32[1]{0}', space=sflag, size = 0x4, scoped, tag = 'scoped memory for tpu_custom_call.1']
    #allocation7 [shape = 'u8[4096]{0}', space=vmem, size = 0x1000, scoped, tag = 'output window, operand 0, single buffered']
    #allocation8 [shape = 'u8[4096]{0}', space=vmem, size = 0x1000, scoped, tag = 'output window, operand 1, single buffered']
    #allocation9 [shape = 's32[1]{0}', space=sflag, size = 0x4, scoped, tag = 'scoped memory for tpu_custom_call.1']
    #allocation10 [shape = 'u8[4096]{0}', space=vmem, size = 0x1000, scoped, tag = 'output window, operand 2, single buffered']
    %10 = vsyncpa [#allocation3], 0
    %11 = vsyncpa [#allocation6], 0
    %12 = vsyncpa [#allocation4], 0
    %13 = vsyncpa [#allocation9], 0
    // Predicated region
    $region2: #{tpu_custom_call.1} parent=1 // pred_check
      _
    $region3: #{tpu_custom_call.1} parent=1 // pred_check_branch
      %15 = sbr.rel (0) target = $region5
    $region4: #{tpu_custom_call.1} parent=1 // pred_region
      %s16 = sadd.s32 0, 0
      %s17 = smul.u32 2, %s16
      %s19 = ssub.s32 256, 256
      %20 = vsyncadd [#allocation3], %s19
      %s21 = smul.addr %s17, 128
      %s22 = scalar_lea.hbm %s0, %s21
      %s24 = sshll.u32 [#allocation2], 4
      %s25 = int_to_ptr.vmem [resolvable:$true] %s24
      %27 = dma.hbm_to_vmem [thread:$0]  %s22, 256, %s25, [#allocation3]
    $region5: #{tpu_custom_call.1} parent=1 // pred_fallthru
      _
    // Predicated region
    $region6: #{tpu_custom_call.1} parent=1 // pred_check
      _
    $region7: #{tpu_custom_call.1} parent=1 // pred_check_branch
      %29 = sbr.rel (0) target = $region9
    $region8: #{tpu_custom_call.1} parent=1 // pred_region
      %s30 = sadd.s32 0, 0
      %s31 = smul.u32 2, %s30
      %s33 = ssub.s32 256, 256
      %34 = vsyncadd [#allocation6], %s33
      %s35 = smul.addr %s31, 128
      %s36 = scalar_lea.hbm %s1, %s35
      %s38 = sshll.u32 [#allocation5], 4
      %s39 = int_to_ptr.vmem [resolvable:$true] %s38
      %41 = dma.hbm_to_vmem [thread:$0]  %s36, 256, %s39, [#allocation6]
    $region9: #{tpu_custom_call.1} parent=1 // pred_fallthru
      _
    // Predicated region
    $region10: #{tpu_custom_call.1} parent=1 // pred_check
      _
    $region11: #{tpu_custom_call.1} parent=1 // pred_check_branch
      %43 = sbr.rel (0) target = $region13
    $region12: #{tpu_custom_call.1} parent=1 // pred_region
      %44 = dma.done [#allocation3], 256
    $region13: #{tpu_custom_call.1} parent=1 // pred_fallthru
      _
    // Predicated region
    $region14: #{tpu_custom_call.1} parent=1 // pred_check
      _
    $region15: #{tpu_custom_call.1} parent=1 // pred_check_branch
      %46 = sbr.rel (0) target = $region17
    $region16: #{tpu_custom_call.1} parent=1 // pred_region
      %47 = dma.done [#allocation6], 256
    $region17: #{tpu_custom_call.1} parent=1 // pred_fallthru
      _
    %s48 = sadd.s32 0, 0
    %s49 = smul.u32 2, %s48
    %s50 = sadd.s32 0, 0
    %s51 = smul.u32 2, %s50
    %p52 = scmp.eq.s32.totalorder 0, 0
    // Predicated region
    $region18: #{tpu_custom_call.1} parent=1 // pred_check
      %p53 = pneg %p52
    $region19: #{tpu_custom_call.1} parent=1 // pred_check_branch
      %55 = sbr.rel (%p53) target = $region21
    $region20: #{tpu_custom_call.1} parent=1 // pred_region
      %56 = vst [vmem:[#allocation7] sm:$0xff] 0.0
      %57 = vst [vmem:[#allocation8] sm:$0xff] 0.0
      %58 = vst [vmem:[#allocation10] sm:$0xff] 0.0
    $region21: #{tpu_custom_call.1} parent=1 // pred_fallthru
      _
    %v59 = vld [vmem:[#allocation2] sm:$0xff]
    %v60 = vld [vmem:[#allocation5] sm:$0xff]
    %v61 = vmul.f32 %v59, %v60
    %v62 = vadd.f32 %v61, 0.0
    %v63 = vmul.f32 %v59, %v59
    %v64 = vadd.f32 %v63, 0.0
    %v65 = vmul.f32 %v60, %v60
    %v66 = vadd.f32 %v65, 0.0
    %s67 = scalar_lea.vmem [#allocation2], 8
    %v68 = vld [vmem:[%s67] sm:$0xff]
    %s69 = scalar_lea.vmem [#allocation5], 8
    %v70 = vld [vmem:[%s69] sm:$0xff]
    %v71 = vmul.f32 %v68, %v70
    %v72 = vadd.f32 %v62, %v71
    %v73 = vmul.f32 %v68, %v68
    %v74 = vadd.f32 %v64, %v73
    %v75 = vmul.f32 %v70, %v70
    %v76 = vadd.f32 %v66, %v75
    %v77 = vld [vmem:[#allocation7] sm:$0xff]
    %v78 = vadd.f32 %v77, %v72
    %79 = vst [vmem:[#allocation7] sm:$0xff] %v78
    %v80 = vld [vmem:[#allocation8] sm:$0xff]
    %v81 = vadd.f32 %v80, %v74
    %82 = vst [vmem:[#allocation8] sm:$0xff] %v81
    %v83 = vld [vmem:[#allocation10] sm:$0xff]
    %v84 = vadd.f32 %v83, %v76
    %85 = vst [vmem:[#allocation10] sm:$0xff] %v84
    // Predicated region
    $region22: #{tpu_custom_call.1} parent=1 // pred_check
      _
    $region23: #{tpu_custom_call.1} parent=1 // pred_check_branch
      %87 = sbr.rel (0) target = $region25
    $region24: #{tpu_custom_call.1} parent=1 // pred_region
      %s89 = ssub.s32 128, 128
      %90 = vsyncadd [#allocation4], %s89
      %s92 = sshll.u32 [#allocation7], 4
      %s93 = int_to_ptr.vmem [resolvable:$true] %s92
      %95 = dma.vmem_to_hbm [thread:$0]  %s93, 128, %s2, [#allocation4]
    $region25: #{tpu_custom_call.1} parent=1 // pred_fallthru
      _
    // Predicated region
    $region26: #{tpu_custom_call.1} parent=1 // pred_check
      _
    $region27: #{tpu_custom_call.1} parent=1 // pred_check_branch
      %97 = sbr.rel (0) target = $region29
    $region28: #{tpu_custom_call.1} parent=1 // pred_region
      %s99 = ssub.s32 128, 128
      %100 = vsyncadd [#allocation9], %s99
      %s102 = sshll.u32 [#allocation8], 4
      %s103 = int_to_ptr.vmem [resolvable:$true] %s102
      %105 = dma.vmem_to_hbm [thread:$0]  %s103, 128, %s3, [#allocation9]
    $region29: #{tpu_custom_call.1} parent=1 // pred_fallthru
      _
    // Predicated region
    $region30: #{tpu_custom_call.1} parent=1 // pred_check
      _
    $region31: #{tpu_custom_call.1} parent=1 // pred_check_branch
      %107 = sbr.rel (0) target = $region33
    $region32: #{tpu_custom_call.1} parent=1 // pred_region
      %s109 = ssub.s32 128, 128
      %110 = vsyncadd [#allocation9], %s109
      %s112 = sshll.u32 [#allocation10], 4
      %s113 = int_to_ptr.vmem [resolvable:$true] %s112
      %115 = dma.vmem_to_hbm [thread:$0]  %s113, 128, %s4, [#allocation9]
    $region33: #{tpu_custom_call.1} parent=1 // pred_fallthru
      _
    // Predicated region
    $region34: #{tpu_custom_call.1} parent=1 // pred_check
      _
    $region35: #{tpu_custom_call.1} parent=1 // pred_check_branch
      %117 = sbr.rel (0) target = $region37
    $region36: #{tpu_custom_call.1} parent=1 // pred_region
      %118 = dma.done [#allocation4], 128
    $region37: #{tpu_custom_call.1} parent=1 // pred_fallthru
      _
    // Predicated region
    $region38: #{tpu_custom_call.1} parent=1 // pred_check
      _
    $region39: #{tpu_custom_call.1} parent=1 // pred_check_branch
      %120 = sbr.rel (0) target = $region41
    $region40: #{tpu_custom_call.1} parent=1 // pred_region
      %121 = dma.done [#allocation9], 128
    $region41: #{tpu_custom_call.1} parent=1 // pred_fallthru
      _
    // Predicated region
    $region42: #{tpu_custom_call.1} parent=1 // pred_check
      _
    $region43: #{tpu_custom_call.1} parent=1 // pred_check_branch
      %123 = sbr.rel (0) target = $region45
    $region44: #{tpu_custom_call.1} parent=1 // pred_region
      %124 = dma.done [#allocation9], 128
    $region45: #{tpu_custom_call.1} parent=1 // pred_fallthru
      _
    %125 = vsyncpa [#allocation3], 1
    %126 = vsyncpa [#allocation6], 1
    %127 = vsyncpa [#allocation4], 1
    %128 = vsyncpa [#allocation9], 1

</llo_original>
